<compile_context>
chip_gen: v7x
topology: tpu7x:2x2x1
jax: 0.10.0
libtpu: 0.0.40
codegen_flags: <defaults>
</compile_context>

<pallas_src>
import functools

import jax
import jax.numpy as jnp
from jax.experimental import pallas as pl
from jax.experimental.pallas import tpu as pltpu

EPS = 1e-5            # nn.BatchNorm1d default eps
NEG_SLOPE = 0.01      # nn.LeakyReLU default negative_slope

# Set to jnp.bfloat16 to trade a little accuracy for ~2x MXU throughput on
# v6e/v7x (accumulation stays float32).  Kept float32 to match PyTorch
# forward numerics.
MATMUL_DTYPE = jnp.float32


def _row_tile(n, max_tile=512):
    """Largest multiple-of-8 divisor of n that is <= max_tile (else n)."""
    if n <= max_tile:
        return n
    t = max_tile - (max_tile % 8)
    while t >= 8:
        if n % t == 0:
            return t
        t -= 8
    return n


# ---------------------------------------------------------------------------
# Kernel 1: partial batch statistics of a flattened (N, C) activation.
# Each grid step writes its own (1, 1, C) partial-sum row -> fully parallel.
# Used only for the very first layer; later layers get their stats from the
# propagation kernel's epilogue.
# ---------------------------------------------------------------------------
def _bn_partial_stats_kernel(x_ref, psum_ref, psumsq_ref):
    x = x_ref[...]                                          # (TM, C)
    psum_ref[0] = jnp.sum(x, axis=0, keepdims=True)         # (1, C)
    psumsq_ref[0] = jnp.sum(x * x, axis=0, keepdims=True)   # (1, C)


def bn_partial_stats(h_flat):
    n, c = h_flat.shape
    tm = _row_tile(n)
    g = n // tm
    psum, psq = pl.pallas_call(
        _bn_partial_stats_kernel,
        out_shape=(jax.ShapeDtypeStruct((g, 1, c), jnp.float32),
                   jax.ShapeDtypeStruct((g, 1, c), jnp.float32)),
        grid=(g,),
        in_specs=[pl.BlockSpec((tm, c), lambda i: (i, 0))],
        out_specs=(pl.BlockSpec((1, 1, c), lambda i: (i, 0, 0)),
                   pl.BlockSpec((1, 1, c), lambda i: (i, 0, 0))),
        compiler_params=pltpu.CompilerParams(
            dimension_semantics=("parallel",)),
    )(h_flat)
    return psum.reshape(g, c), psq.reshape(g, c)


# ---------------------------------------------------------------------------
# Kernel 2: fold BatchNorm (batch stats) into the linear layer.
#   scale = gamma * rsqrt(var + eps)
#   b_eff = (beta - mean*scale) @ W + b
# Tiny O(C^2) work, single block, no grid.
# ---------------------------------------------------------------------------
def _bn_fold_kernel(psum_ref, psumsq_ref, gamma_ref, beta_ref, w_ref, b_ref,
                    scale_ref, beff_ref, *, inv_n):
    mean = jnp.sum(psum_ref[...], axis=0, keepdims=True) * inv_n     # (1, C)
    ex2 = jnp.sum(psumsq_ref[...], axis=0, keepdims=True) * inv_n    # (1, C)
    var = jnp.maximum(ex2 - mean * mean, 0.0)                        # biased
    scale = gamma_ref[...] * jax.lax.rsqrt(var + EPS)                # (1, C)
    shift = beta_ref[...] - mean * scale                             # (1, C)
    b_eff = jnp.dot(shift, w_ref[...],
                    preferred_element_type=jnp.float32) + b_ref[...]
    scale_ref[...] = scale
    beff_ref[...] = b_eff


def bn_fold(psum, psq, gamma, beta, w, b, n):
    c = w.shape[0]
    return pl.pallas_call(
        functools.partial(_bn_fold_kernel, inv_n=1.0 / float(n)),
        out_shape=(jax.ShapeDtypeStruct((1, c), jnp.float32),
                   jax.ShapeDtypeStruct((1, c), jnp.float32)),
    )(psum, psq, gamma, beta, w, b)


# ---------------------------------------------------------------------------
# Kernel 3: batched feature transform on the flattened activations:
#   X = (H * scale) @ W + b_eff            (BN folded into scale / b_eff)
# Row-tiled over B*L so the matmul M dimension fills the MXU.
# ---------------------------------------------------------------------------
def _gcn_transform_kernel(h_ref, scale_ref, beff_ref, w_ref, x_ref):
    h = h_ref[...] * scale_ref[...]                                  # (TM, C)
    x_ref[...] = jnp.dot(h.astype(MATMUL_DTYPE),
                         w_ref[...].astype(MATMUL_DTYPE),
                         preferred_element_type=jnp.float32) + beff_ref[...]


def gcn_transform(h_flat, scale, b_eff, w):
    n, c = h_flat.shape
    tm = _row_tile(n)
    return pl.pallas_call(
        _gcn_transform_kernel,
        out_shape=jax.ShapeDtypeStruct((n, c), jnp.float32),
        grid=(n // tm,),
        in_specs=[pl.BlockSpec((tm, c), lambda i: (i, 0)),    # H rows
                  pl.BlockSpec((1, c), lambda i: (0, 0)),     # scale
                  pl.BlockSpec((1, c), lambda i: (0, 0)),     # b_eff
                  pl.BlockSpec((c, c), lambda i: (0, 0))],    # W (in, out)
        out_specs=pl.BlockSpec((tm, c), lambda i: (i, 0)),
        compiler_params=pltpu.CompilerParams(
            dimension_semantics=("parallel",)),
    )(h_flat, scale, b_eff, w)


# ---------------------------------------------------------------------------
# Kernel 4: graph propagation + LeakyReLU, per batch element, with the next
# layer's partial batch statistics fused into the epilogue.
#   out = LeakyReLU( s * ( A @ (s*X) + s*X ) ),  s = rowsum(A+I)^-1/2
# ---------------------------------------------------------------------------
def _gcn_propagate_kernel(a_ref, x_ref, o_ref, psum_ref, psumsq_ref):
    a = a_ref[0]                                             # (L, L)
    x = x_ref[...]                                           # (L, C)

    d = jnp.sum(a, axis=1, keepdims=True) + 1.0              # rowsum(A + I)
    s = jax.lax.rsqrt(d)                                     # (L, 1)

    y = x * s                                                # D^-1/2 X
    z = jnp.dot(a.astype(MATMUL_DTYPE), y.astype(MATMUL_DTYPE),
                preferred_element_type=jnp.float32) + y      # (A + I) @ y
    out = z * s                                              # D^-1/2 (...)
    out = jnp.where(out >= 0, out, NEG_SLOPE * out)          # LeakyReLU

    o_ref[...] = out
    # Partial batch statistics of this layer's output (next layer's BN input)
    psum_ref[0] = jnp.sum(out, axis=0, keepdims=True)
    psumsq_ref[0] = jnp.sum(out * out, axis=0, keepdims=True)


def gcn_propagate(x_flat, a):
    b, l, _ = a.shape
    n, c = x_flat.shape
    out, psum, psq = pl.pallas_call(
        _gcn_propagate_kernel,
        out_shape=(jax.ShapeDtypeStruct((n, c), jnp.float32),
                   jax.ShapeDtypeStruct((b, 1, c), jnp.float32),
                   jax.ShapeDtypeStruct((b, 1, c), jnp.float32)),
        grid=(b,),
        in_specs=[pl.BlockSpec((1, l, l), lambda i: (i, 0, 0)),   # A
                  pl.BlockSpec((l, c), lambda i: (i, 0))],        # X rows
        out_specs=(pl.BlockSpec((l, c), lambda i: (i, 0)),
                   pl.BlockSpec((1, 1, c), lambda i: (i, 0, 0)),
                   pl.BlockSpec((1, 1, c), lambda i: (i, 0, 0))),
        compiler_params=pltpu.CompilerParams(
            dimension_semantics=("parallel",)),
    )(a, x_flat)
    return out, psum.reshape(b, c), psq.reshape(b, c)


# ---------------------------------------------------------------------------
# GCN module: stack of layers_count identical-width GCNLayers
# ---------------------------------------------------------------------------
def init_gcn_params(channel, layers_count, key):
    params = []
    bound = 1.0 / float(channel) ** 0.5
    for _ in range(layers_count):
        key, k1, k2 = jax.random.split(key, 3)
        # Linear(input_dim, output_dim); stored pre-transposed as (in, out)
        w = jax.random.uniform(k1, (channel, channel), jnp.float32, -bound, bound)
        b = jax.random.uniform(k2, (1, channel), jnp.float32, -bound, bound)
        gamma = jnp.ones((1, channel), jnp.float32)   # BatchNorm1d weight
        beta = jnp.zeros((1, channel), jnp.float32)   # BatchNorm1d bias
        params.append((w, b, gamma, beta))
    return params


def gcn_forward(x, A, params):
    B, L, C = x.shape
    N = B * L
    h = x.reshape(N, C)                       # flattened activations (B*L, C)
    psum, psq = bn_partial_stats(h)           # stats for the first layer's BN
    for (w, b, gamma, beta) in params:
        scale, b_eff = bn_fold(psum, psq, gamma, beta, w, b, N)
        xfeat = gcn_transform(h, scale, b_eff, w)
        h, psum, psq = gcn_propagate(xfeat, A)   # also emits next-layer stats
    return h.reshape(B, L, C)


if __name__ == "__main__":
    # Small shapes consistent with the module: height*width nodes, `channel` feats
    height, width, channel, layers_count = 4, 4, 32, 2
    B = 2
    L = height * width

    key = jax.random.PRNGKey(0)
    key, kx, ka, kp = jax.random.split(key, 4)

    x = jax.random.normal(kx, (B, L, channel), jnp.float32)
    A_raw = jax.random.uniform(ka, (B, L, L), jnp.float32)      # nonnegative
    A = 0.5 * (A_raw + jnp.transpose(A_raw, (0, 2, 1)))         # symmetric adjacency

    params = init_gcn_params(channel, layers_count, kp)

    out = gcn_forward(x, A, params)
    jax.block_until_ready(out)

    assert out.shape == (B, L, channel) and out.dtype == jnp.float32
    assert bool(jnp.all(jnp.isfinite(out)))
    print("KERNEL_OK")
</pallas_src>

<mosaic_0001>
module attributes {stable_mosaic.version = 11 : i64} {
  func.func @_bn_partial_stats_kernel(%arg0: i32, %arg1: memref<32x32xf32, #tpu.memory_space<vmem>>, %arg2: memref<1x1x32xf32, #tpu.memory_space<vmem>>, %arg3: memref<1x1x32xf32, #tpu.memory_space<vmem>>) attributes {dimension_semantics = [#tpu.dimension_semantics<parallel>], iteration_bounds = array<i64: 1>, scalar_prefetch = 0 : i64, scratch_operands = 0 : i64, tpu.core_type = #tpu.core_type<tc>, window_params = [{transform_indices = @transform_0, window_bounds = array<i64: 32, 32>}, {transform_indices = @transform_1, window_bounds = array<i64: 1, 1, 32>}, {transform_indices = @transform_2, window_bounds = array<i64: 1, 1, 32>}]} {
    %c0 = arith.constant 0 : index
    %c0_0 = arith.constant 0 : index
    %0 = vector.load %arg1[%c0, %c0_0] : memref<32x32xf32, #tpu.memory_space<vmem>>, vector<32x32xf32>
    %cst = arith.constant dense<0.000000e+00> : vector<32xf32>
    %1 = vector.multi_reduction <add>, %0, %cst [0] : vector<32x32xf32> to vector<32xf32>
    %2 = vector.shape_cast %1 : vector<32xf32> to vector<1x32xf32>
    %c0_1 = arith.constant 0 : index
    %c0_2 = arith.constant 0 : index
    %c0_3 = arith.constant 0 : index
    %3 = vector.load %arg2[%c0_1, %c0_2, %c0_3] : memref<1x1x32xf32, #tpu.memory_space<vmem>>, vector<1x1x32xf32>
    %4 = vector.shape_cast %3 : vector<1x1x32xf32> to vector<1x32xf32>
    %5 = vector.shape_cast %2 : vector<1x32xf32> to vector<1x1x32xf32>
    tpu.vector_store %arg2[%c0_1, %c0_2, %c0_3], %5 {strides = array<i32>} : memref<1x1x32xf32, #tpu.memory_space<vmem>>, vector<1x1x32xf32>,
    %6 = arith.mulf %0, %0 : vector<32x32xf32>
    %cst_4 = arith.constant dense<0.000000e+00> : vector<32xf32>
    %7 = vector.multi_reduction <add>, %6, %cst_4 [0] : vector<32x32xf32> to vector<32xf32>
    %8 = vector.shape_cast %7 : vector<32xf32> to vector<1x32xf32>
    %c0_5 = arith.constant 0 : index
    %c0_6 = arith.constant 0 : index
    %c0_7 = arith.constant 0 : index
    %9 = vector.load %arg3[%c0_5, %c0_6, %c0_7] : memref<1x1x32xf32, #tpu.memory_space<vmem>>, vector<1x1x32xf32>
    %10 = vector.shape_cast %9 : vector<1x1x32xf32> to vector<1x32xf32>
    %11 = vector.shape_cast %8 : vector<1x32xf32> to vector<1x1x32xf32>
    tpu.vector_store %arg3[%c0_5, %c0_6, %c0_7], %11 {strides = array<i32>} : memref<1x1x32xf32, #tpu.memory_space<vmem>>, vector<1x1x32xf32>,
    return
  }
  func.func @transform_0(%arg0: i32) -> (i32, i32) {
    %c0_i32 = arith.constant 0 : i32
    %c0_i32_0 = arith.constant 0 : i32
    return %arg0, %c0_i32 : i32, i32
  }
  func.func @transform_1(%arg0: i32) -> (i32, i32, i32) {
    %c0_i32 = arith.constant 0 : i32
    %c0_i32_0 = arith.constant 0 : i32
    %c0_i32_1 = arith.constant 0 : i32
    return %arg0, %c0_i32, %c0_i32_0 : i32, i32, i32
  }
  func.func @transform_2(%arg0: i32) -> (i32, i32, i32) {
    %c0_i32 = arith.constant 0 : i32
    %c0_i32_0 = arith.constant 0 : i32
    %c0_i32_1 = arith.constant 0 : i32
    return %arg0, %c0_i32, %c0_i32_0 : i32, i32, i32
  }
}

</mosaic_0001>

<llo_original>
// kernel: tpu_custom_call.1
$region0: #{tpu_custom_call.1}
  #allocation0 [shape = 'u32[]', space=smem, size = 0x4, offset = 0x4, fixed_abs, tag = 'smem constant byte address 0x4 - core index']
  #allocation1 [shape = 'u32[144,128]{1,0:T(1,128)}', space=vmem, size = 0x12000, scoped, tag = 'internal scratch']
  %s0 = inlined_call_operand.hbm [shape: f32[32,32], index: 0, kind: input, shape index: {}]
  %s1 = inlined_call_operand.hbm [shape: f32[1,1,32], index: 1, kind: output, shape index: {0}]
  %s2 = inlined_call_operand.hbm [shape: f32[1,1,32], index: 2, kind: output, shape index: {1}]
  %3 = xla_tuple %s1, %s2
  %s4 = sld [smem:[#allocation0]]
  $region26: #{tpu_custom_call.1} parent=0
    _
  %s6 = ssub.s32 1, %s4
  %s7 = scalar_select 0, %s6, %s4
  $region1: #{tpu_custom_call.1} parent=0
    #allocation2 [shape = 'u8[16384]{0}', space=vmem, size = 0x4000, scoped, tag = 'input window, operand 0, single buffered']
    #allocation3 [shape = 's32[1]{0}', space=sflag, size = 0x4, scoped, tag = 'scoped memory for tpu_custom_call.1']
    #allocation4 [shape = 's32[1]{0}', space=sflag, size = 0x4, scoped, tag = 'scoped memory for tpu_custom_call.1']
    #allocation5 [shape = 'u8[512]{0}', space=vmem, size = 0x400, scoped, tag = 'output window, operand 0, single buffered']
    #allocation6 [shape = 'u8[512]{0}', space=vmem, size = 0x400, scoped, tag = 'output window, operand 1, single buffered']
    #allocation7 [shape = 's32[1]{0}', space=sflag, size = 0x4, scoped, tag = 'scoped memory for tpu_custom_call.1']
    %8 = vsyncpa [#allocation3], 0
    %9 = vsyncpa [#allocation4], 0
    %10 = vsyncpa [#allocation7], 0
    // Predicated region
    $region2: #{tpu_custom_call.1} parent=1 // pred_check
      _
    $region3: #{tpu_custom_call.1} parent=1 // pred_check_branch
      %12 = sbr.rel (0) target = $region5
    $region4: #{tpu_custom_call.1} parent=1 // pred_region
      %s14 = ssub.s32 512, 512
      %15 = vsyncadd [#allocation3], %s14
      %s16 = sshll.u32 [#allocation2], 4
      %s17 = int_to_ptr.vmem [resolvable:$true] %s16
      %22 = dma.hbm_to_vmem [thread:$0]  %s0, 512, %s17, [#allocation3], 128, 128, 8
    $region5: #{tpu_custom_call.1} parent=1 // pred_fallthru
      _
    // Predicated region
    $region6: #{tpu_custom_call.1} parent=1 // pred_check
      _
    $region7: #{tpu_custom_call.1} parent=1 // pred_check_branch
      %24 = sbr.rel (0) target = $region9
    $region8: #{tpu_custom_call.1} parent=1 // pred_region
      %25 = dma.done [#allocation3], 512
    $region9: #{tpu_custom_call.1} parent=1 // pred_fallthru
      _
    %v26 = vld [vmem:[#allocation2] sm:$0xff]
    %v27 = vld [vmem:[#allocation2 + $0x8] sm:$0xff]
    %v28 = vld [vmem:[#allocation2 + $0x10] sm:$0xff]
    %v29 = vld [vmem:[#allocation2 + $0x18] sm:$0xff]
    %vm30 = vcmask 261120
    %v31 = vsel %vm30, %v26, 0.0
    %v32 = vsel %vm30, %v27, 0.0
    %v33 = vadd.f32 %v31, %v32
    %v34 = vsel %vm30, %v28, 0.0
    %v35 = vadd.f32 %v33, %v34
    %v36 = vsel %vm30, %v29, 0.0
    %v37 = vadd.f32 %v35, %v36
    %v38 = vrot.slane %v37, 4
    %v39 = vadd.f32 %v37, %v38
    %v40 = vrot.slane %v39, 2
    %v41 = vadd.f32 %v39, %v40
    %v42 = vrot.slane %v41, 1
    %v43 = vadd.f32 %v41, %v42
    %vm44 = vcmask 253952
    %45 = vst.msk [vmem:[#allocation5] sm:$0x1] %vm44, %v43
    %v46 = vmul.f32 %v26, %v26
    %v47 = vmul.f32 %v27, %v27
    %v48 = vmul.f32 %v28, %v28
    %v49 = vmul.f32 %v29, %v29
    %v50 = vsel %vm30, %v46, 0.0
    %v51 = vsel %vm30, %v47, 0.0
    %v52 = vadd.f32 %v50, %v51
    %v53 = vsel %vm30, %v48, 0.0
    %v54 = vadd.f32 %v52, %v53
    %v55 = vsel %vm30, %v49, 0.0
    %v56 = vadd.f32 %v54, %v55
    %v57 = vrot.slane %v56, 4
    %v58 = vadd.f32 %v56, %v57
    %v59 = vrot.slane %v58, 2
    %v60 = vadd.f32 %v58, %v59
    %v61 = vrot.slane %v60, 1
    %v62 = vadd.f32 %v60, %v61
    %63 = vst.msk [vmem:[#allocation6] sm:$0x1] %vm44, %v62
    // Predicated region
    $region10: #{tpu_custom_call.1} parent=1 // pred_check
      _
    $region11: #{tpu_custom_call.1} parent=1 // pred_check_branch
      %65 = sbr.rel (0) target = $region13
    $region12: #{tpu_custom_call.1} parent=1 // pred_region
      %s67 = ssub.s32 16, 16
      %68 = vsyncadd [#allocation4], %s67
      %s70 = sshll.u32 [#allocation5], 4
      %s71 = int_to_ptr.vmem [resolvable:$true] %s70
      %73 = dma.vmem_to_hbm [thread:$0]  %s71, 16, %s1, [#allocation4]
    $region13: #{tpu_custom_call.1} parent=1 // pred_fallthru
      _
    // Predicated region
    $region14: #{tpu_custom_call.1} parent=1 // pred_check
      _
    $region15: #{tpu_custom_call.1} parent=1 // pred_check_branch
      %75 = sbr.rel (0) target = $region17
    $region16: #{tpu_custom_call.1} parent=1 // pred_region
      %s77 = ssub.s32 16, 16
      %78 = vsyncadd [#allocation7], %s77
      %s80 = sshll.u32 [#allocation6], 4
      %s81 = int_to_ptr.vmem [resolvable:$true] %s80
      %83 = dma.vmem_to_hbm [thread:$0]  %s81, 16, %s2, [#allocation7]
    $region17: #{tpu_custom_call.1} parent=1 // pred_fallthru
      _
    // Predicated region
    $region18: #{tpu_custom_call.1} parent=1 // pred_check
      _
    $region19: #{tpu_custom_call.1} parent=1 // pred_check_branch
      %85 = sbr.rel (0) target = $region21
    $region20: #{tpu_custom_call.1} parent=1 // pred_region
      %86 = dma.done [#allocation4], 16
    $region21: #{tpu_custom_call.1} parent=1 // pred_fallthru
      _
    // Predicated region
    $region22: #{tpu_custom_call.1} parent=1 // pred_check
      _
    $region23: #{tpu_custom_call.1} parent=1 // pred_check_branch
      %88 = sbr.rel (0) target = $region25
    $region24: #{tpu_custom_call.1} parent=1 // pred_region
      %89 = dma.done [#allocation7], 16
    $region25: #{tpu_custom_call.1} parent=1 // pred_fallthru
      _
    %90 = vsyncpa [#allocation3], 1
    %91 = vsyncpa [#allocation4], 1
    %92 = vsyncpa [#allocation7], 1

</llo_original>
